<compile_context>
chip_gen: v6e
topology: v6e:2x2x1
jax: 0.10.0
libtpu: 0.0.40
codegen_flags: <defaults>
</compile_context>

<pallas_src>
import functools

import jax
import jax.numpy as jnp
from jax.experimental import pallas as pl
from jax.experimental.pallas import tpu as pltpu

_LANES = 128
_SUBLANES = 8
_MIN_ROWS = 16                          # bf16 min tile is (16, 128)
_CHUNK = _MIN_ROWS * _LANES             # 2048 elements
_ROW_CHUNK = 512                        # in-kernel compute sub-chunk (rows)
_TARGET_BLOCK_BYTES = 4 * 1024 * 1024   # per input per grid step (native dtype)


def _num_tensorcores():
    """Best-effort TensorCores-per-chip query (2 on v7x). Defaults to 1."""
    candidates = []
    try:
        info = pltpu.get_tpu_info()
        for name in ("num_cores", "core_count", "num_tensorcores",
                     "tensorcore_count", "cores_per_chip"):
            candidates.append(getattr(info, name, None))
    except Exception:
        pass
    try:
        candidates.append(getattr(jax.devices()[0], "num_cores", None))
    except Exception:
        pass
    for v in candidates:
        try:
            v = int(v)
        except (TypeError, ValueError):
            continue
        if v >= 1:
            return min(v, 2)
    return 1


def _dice_sums_kernel(x_ref, t_ref, xt_ref, xpt_ref, *,
                      rows, block_rows, row_chunk, steps_per_core, needs_mask):
    c = pl.program_id(0)   # TensorCore split axis (CORE_PARALLEL on v7x)
    i = pl.program_id(1)   # sequential reduction axis ("arbitrary")

    @pl.when(i == 0)
    def _init():
        xt_ref[...] = jnp.zeros_like(xt_ref)
        xpt_ref[...] = jnp.zeros_like(xpt_ref)

    n_sub = block_rows // row_chunk

    def accumulate(masked, base):
        # Static Python loop over sub-chunks: bounds f32 temporaries to
        # ~1 MiB while keeping the DMA block (and HBM step size) large.
        for j in range(n_sub):
            r0 = j * row_chunk
            xs = x_ref[pl.ds(r0, row_chunk), :].astype(jnp.float32)
            ts = t_ref[pl.ds(r0, row_chunk), :].astype(jnp.float32)
            if masked:
                rid = base + r0 + jax.lax.broadcasted_iota(
                    jnp.int32, (row_chunk, _LANES), 0)
                keep = rid < rows
                xs = jnp.where(keep, xs, 0.0)
                ts = jnp.where(keep, ts, 0.0)
            prod = (xs * ts).reshape(row_chunk // _SUBLANES, _SUBLANES, _LANES)
            ssum = (xs + ts).reshape(row_chunk // _SUBLANES, _SUBLANES, _LANES)
            # Keep partials sublane-shaped (pure vreg adds); the cross-
            # sublane/lane reduce happens once in the JAX epilogue.
            xt_ref[...] += jnp.sum(prod, axis=0, keepdims=True)
            xpt_ref[...] += jnp.sum(ssum, axis=0, keepdims=True)

    if needs_mask:
        base = (c * steps_per_core + i) * block_rows
        in_range = base + block_rows <= rows

        @pl.when(in_range)
        def _full():
            accumulate(False, base)

        @pl.when(jnp.logical_not(in_range))
        def _ragged():
            # Ragged last block or phantom clamped block (split core):
            # out-of-range rows are zeroed, so clamped re-reads contribute 0.
            accumulate(True, base)
    else:
        accumulate(False, 0)


def dice_loss(inp, target, epsilon=1e-9):
    assert inp.shape == target.shape
    n = inp.size

    xf = inp.reshape(-1)
    tf = target.reshape(-1)

    n_main = (n // _CHUNK) * _CHUNK
    eps = jnp.float32(epsilon)
    nf = jnp.float32(n)

    if n_main == 0:
        # Input smaller than one (16,128) tile: plain JAX.
        x32 = xf.astype(jnp.float32)
        t32 = tf.astype(jnp.float32)
        s1 = jnp.sum(x32 * t32)
        s2 = jnp.sum(x32 + t32)
    else:
        # TODO(synk): if the natural trailing dim of `inp` is not a multiple of
        # 128, XLA may insert a relayout copy for this lane-dense reshape;
        # streaming the natural 2D shape with in-kernel lane masking would avoid it.
        rows = n_main // _LANES                       # multiple of 16
        x2 = xf[:n_main].reshape(rows, _LANES)
        t2 = tf[:n_main].reshape(rows, _LANES)

        itemsize = max(jnp.dtype(inp.dtype).itemsize,
                       jnp.dtype(target.dtype).itemsize)

        if rows <= _ROW_CHUNK:
            block_rows = rows
            row_chunk = rows
        else:
            target_rows = _TARGET_BLOCK_BYTES // (_LANES * itemsize)
            block_rows = min(target_rows, rows)
            block_rows = max(_ROW_CHUNK, (block_rows // _ROW_CHUNK) * _ROW_CHUNK)
            row_chunk = _ROW_CHUNK

        nb = pl.cdiv(rows, block_rows)

        cores = _num_tensorcores()
        # Split across TensorCores only when (a) the chip has >1 TC (v7x) and
        # (b) a phantom clamped-block DMA is either absent (nb % cores == 0)
        # or amortized (nb >= 8).  Single-TC chips take the plain path.
        if cores >= 2 and nb >= 2 and (nb % cores == 0 or nb >= 8):
            num_splits = cores
        else:
            num_splits = 1
        spc = pl.cdiv(nb, num_splits)                 # steps per core
        needs_mask = (num_splits * spc * block_rows != rows)

        if num_splits * spc == nb:
            def in_map(c, i):
                return (c * spc + i, 0)
        else:
            def in_map(c, i):
                # Clamp so phantom steps read an in-range block; the masked
                # kernel path zeroes their contribution.
                return (jnp.minimum(c * spc + i, nb - 1), 0)

        kernel = functools.partial(
            _dice_sums_kernel,
            rows=rows, block_rows=block_rows, row_chunk=row_chunk,
            steps_per_core=spc, needs_mask=needs_mask)

        out_shape = (
            jax.ShapeDtypeStruct((num_splits, _SUBLANES, _LANES), jnp.float32),
            jax.ShapeDtypeStruct((num_splits, _SUBLANES, _LANES), jnp.float32),
        )

        lead_sem = pltpu.CORE_PARALLEL if num_splits > 1 else pltpu.ARBITRARY

        bytes_in = int(x2.size * x2.dtype.itemsize + t2.size * t2.dtype.itemsize)
        cost = pl.CostEstimate(
            flops=4 * n_main, transcendentals=0,
            bytes_accessed=bytes_in + 2 * num_splits * _SUBLANES * _LANES * 4)

        sum_xt, sum_xpt = pl.pallas_call(
            kernel,
            out_shape=out_shape,
            grid_spec=pltpu.PrefetchScalarGridSpec(
                num_scalar_prefetch=0,
                grid=(num_splits, spc),
                in_specs=[
                    pl.BlockSpec((block_rows, _LANES), in_map),
                    pl.BlockSpec((block_rows, _LANES), in_map),
                ],
                out_specs=(
                    pl.BlockSpec((1, _SUBLANES, _LANES), lambda c, i: (c, 0, 0)),
                    pl.BlockSpec((1, _SUBLANES, _LANES), lambda c, i: (c, 0, 0)),
                ),
            ),
            compiler_params=pltpu.CompilerParams(
                dimension_semantics=(lead_sem, pltpu.ARBITRARY),
                vmem_limit_bytes=32 * 1024 * 1024),
            cost_estimate=cost,
        )(x2, t2)

        s1 = jnp.sum(sum_xt)     # sum(input * target) over the aligned prefix
        s2 = jnp.sum(sum_xpt)    # sum(input + target) over the aligned prefix

        if n_main < n:           # <2048-element tail summed in plain JAX
            x_tail = xf[n_main:].astype(jnp.float32)
            t_tail = tf[n_main:].astype(jnp.float32)
            s1 = s1 + jnp.sum(x_tail * t_tail)
            s2 = s2 + jnp.sum(x_tail + t_tail)

    A = s1 + nf * eps                  # (input*target + eps).sum()
    B = s2 + nf * eps                  # (input + target + eps).sum()
    C = nf - s2 + s1 + nf * eps        # ((1-input)*(1-target) + eps).sum()
    D = 2.0 * nf - s2 + nf * eps       # (1-input + (1-target) + eps).sum()

    return (1.0 - A / B - C) / D


def _dice_loss_ref(inp, target, epsilon=1e-9):
    inp = inp.astype(jnp.float32)
    target = target.astype(jnp.float32)
    return (1.0 - (inp * target + epsilon).sum() / (inp + target + epsilon).sum()
            - ((1.0 - inp) * (1.0 - target) + epsilon).sum()) / \
           (1.0 - inp + (1.0 - target) + epsilon).sum()


if __name__ == "__main__":
    key = jax.random.PRNGKey(0)
    k1, k2, k3, k4, k5, k6 = jax.random.split(key, 6)

    # 1) Small segmentation-style (N, C, H, W) input — primary check.
    x = jax.random.uniform(k1, (2, 4, 16, 16), dtype=jnp.float32)
    t = (jax.random.uniform(k2, (2, 4, 16, 16), dtype=jnp.float32) > 0.5).astype(jnp.float32)
    out = jax.block_until_ready(dice_loss(x, t))
    ref = _dice_loss_ref(x, t)
    assert jnp.allclose(out, ref, rtol=1e-5, atol=1e-5), (out, ref)

    # 2) bf16 + ragged total size: kernel streams the aligned prefix natively,
    #    the tail is summed in JAX (no full-tensor pad).
    xb = jax.random.uniform(k3, (4, 3, 33, 17), dtype=jnp.float32).astype(jnp.bfloat16)
    tb = (jax.random.uniform(k4, (4, 3, 33, 17), dtype=jnp.float32) > 0.5).astype(jnp.bfloat16)
    out_b = jax.block_until_ready(dice_loss(xb, tb))
    ref_b = _dice_loss_ref(xb, tb)
    assert jnp.allclose(out_b, ref_b, rtol=1e-4, atol=1e-4), (out_b, ref_b)

    # 3) Multi-block f32 with a ragged last block (exercises gated masking).
    xl = jax.random.uniform(k5, (1040, 1024), dtype=jnp.float32)
    tl = (jax.random.uniform(k6, (1040, 1024), dtype=jnp.float32) > 0.5).astype(jnp.float32)
    out_l = jax.block_until_ready(dice_loss(xl, tl))
    ref_l = _dice_loss_ref(xl, tl)
    assert jnp.allclose(out_l, ref_l, rtol=1e-5, atol=1e-5), (out_l, ref_l)

    print("KERNEL_OK")
</pallas_src>

<mosaic_0001>
module attributes {stable_mosaic.version = 11 : i64} {
  func.func @_dice_sums_kernel(%arg0: i32, %arg1: i32, %arg2: memref<16x128xf32, #tpu.memory_space<vmem>>, %arg3: memref<16x128xf32, #tpu.memory_space<vmem>>, %arg4: memref<1x8x128xf32, #tpu.memory_space<vmem>>, %arg5: memref<1x8x128xf32, #tpu.memory_space<vmem>>) attributes {dimension_semantics = [#tpu.dimension_semantics<arbitrary>, #tpu.dimension_semantics<arbitrary>], iteration_bounds = array<i64: 1, 1>, scalar_prefetch = 0 : i64, scratch_operands = 0 : i64, tpu.core_type = #tpu.core_type<tc>, window_params = [{transform_indices = @transform_0, window_bounds = array<i64: 16, 128>}, {transform_indices = @transform_1, window_bounds = array<i64: 16, 128>}, {transform_indices = @transform_2, window_bounds = array<i64: 1, 8, 128>}, {transform_indices = @transform_3, window_bounds = array<i64: 1, 8, 128>}]} {
    %c0_i32 = arith.constant 0 : i32
    %0 = arith.cmpi eq, %arg1, %c0_i32 : i32
    %1 = arith.extui %0 : i1 to i32
    %c0_i32_0 = arith.constant 0 : i32
    %2 = arith.cmpi ne, %1, %c0_i32_0 : i32
    scf.if %2 {
      %cst_17 = arith.constant 0.000000e+00 : f32
      %19 = vector.broadcast %cst_17 : f32 to vector<1x8x128xf32>
      %c0_18 = arith.constant 0 : index
      %c0_19 = arith.constant 0 : index
      %c0_20 = arith.constant 0 : index
      %20 = vector.load %arg4[%c0_18, %c0_19, %c0_20] : memref<1x8x128xf32, #tpu.memory_space<vmem>>, vector<1x8x128xf32>
      tpu.vector_store %arg4[%c0_18, %c0_19, %c0_20], %19 {strides = array<i32>} : memref<1x8x128xf32, #tpu.memory_space<vmem>>, vector<1x8x128xf32>,
      %cst_21 = arith.constant 0.000000e+00 : f32
      %21 = vector.broadcast %cst_21 : f32 to vector<1x8x128xf32>
      %c0_22 = arith.constant 0 : index
      %c0_23 = arith.constant 0 : index
      %c0_24 = arith.constant 0 : index
      %22 = vector.load %arg5[%c0_22, %c0_23, %c0_24] : memref<1x8x128xf32, #tpu.memory_space<vmem>>, vector<1x8x128xf32>
      tpu.vector_store %arg5[%c0_22, %c0_23, %c0_24], %21 {strides = array<i32>} : memref<1x8x128xf32, #tpu.memory_space<vmem>>, vector<1x8x128xf32>,
    } else {
    }
    %c0 = arith.constant 0 : index
    %c0_1 = arith.constant 0 : index
    %3 = vector.load %arg2[%c0, %c0_1] : memref<16x128xf32, #tpu.memory_space<vmem>>, vector<16x128xf32>
    %c0_2 = arith.constant 0 : index
    %c0_3 = arith.constant 0 : index
    %4 = vector.load %arg3[%c0_2, %c0_3] : memref<16x128xf32, #tpu.memory_space<vmem>>, vector<16x128xf32>
    %5 = arith.mulf %3, %4 : vector<16x128xf32>
    %6 = vector.shape_cast %5 : vector<16x128xf32> to vector<2x8x128xf32>
    %7 = arith.addf %3, %4 : vector<16x128xf32>
    %8 = vector.shape_cast %7 : vector<16x128xf32> to vector<2x8x128xf32>
    %c0_4 = arith.constant 0 : index
    %c0_5 = arith.constant 0 : index
    %c0_6 = arith.constant 0 : index
    %9 = vector.load %arg4[%c0_4, %c0_5, %c0_6] : memref<1x8x128xf32, #tpu.memory_space<vmem>>, vector<1x8x128xf32>
    %cst = arith.constant dense<0.000000e+00> : vector<8x128xf32>
    %10 = vector.multi_reduction <add>, %6, %cst [0] : vector<2x8x128xf32> to vector<8x128xf32>
    %11 = vector.shape_cast %10 : vector<8x128xf32> to vector<1x8x128xf32>
    %12 = arith.addf %9, %11 : vector<1x8x128xf32>
    %c0_7 = arith.constant 0 : index
    %c0_8 = arith.constant 0 : index
    %c0_9 = arith.constant 0 : index
    %13 = vector.load %arg4[%c0_7, %c0_8, %c0_9] : memref<1x8x128xf32, #tpu.memory_space<vmem>>, vector<1x8x128xf32>
    tpu.vector_store %arg4[%c0_7, %c0_8, %c0_9], %12 {strides = array<i32>} : memref<1x8x128xf32, #tpu.memory_space<vmem>>, vector<1x8x128xf32>,
    %c0_10 = arith.constant 0 : index
    %c0_11 = arith.constant 0 : index
    %c0_12 = arith.constant 0 : index
    %14 = vector.load %arg5[%c0_10, %c0_11, %c0_12] : memref<1x8x128xf32, #tpu.memory_space<vmem>>, vector<1x8x128xf32>
    %cst_13 = arith.constant dense<0.000000e+00> : vector<8x128xf32>
    %15 = vector.multi_reduction <add>, %8, %cst_13 [0] : vector<2x8x128xf32> to vector<8x128xf32>
    %16 = vector.shape_cast %15 : vector<8x128xf32> to vector<1x8x128xf32>
    %17 = arith.addf %14, %16 : vector<1x8x128xf32>
    %c0_14 = arith.constant 0 : index
    %c0_15 = arith.constant 0 : index
    %c0_16 = arith.constant 0 : index
    %18 = vector.load %arg5[%c0_14, %c0_15, %c0_16] : memref<1x8x128xf32, #tpu.memory_space<vmem>>, vector<1x8x128xf32>
    tpu.vector_store %arg5[%c0_14, %c0_15, %c0_16], %17 {strides = array<i32>} : memref<1x8x128xf32, #tpu.memory_space<vmem>>, vector<1x8x128xf32>,
    return
  }
  func.func @transform_0(%arg0: i32, %arg1: i32) -> (i32, i32) {
    %c1_i32 = arith.constant 1 : i32
    %0 = arith.muli %arg0, %c1_i32 : i32
    %1 = arith.addi %0, %arg1 : i32
    %c0_i32 = arith.constant 0 : i32
    %c0_i32_0 = arith.constant 0 : i32
    return %1, %c0_i32 : i32, i32
  }
  func.func @transform_1(%arg0: i32, %arg1: i32) -> (i32, i32) {
    %c1_i32 = arith.constant 1 : i32
    %0 = arith.muli %arg0, %c1_i32 : i32
    %1 = arith.addi %0, %arg1 : i32
    %c0_i32 = arith.constant 0 : i32
    %c0_i32_0 = arith.constant 0 : i32
    return %1, %c0_i32 : i32, i32
  }
  func.func @transform_2(%arg0: i32, %arg1: i32) -> (i32, i32, i32) {
    %c0_i32 = arith.constant 0 : i32
    %c0_i32_0 = arith.constant 0 : i32
    %c0_i32_1 = arith.constant 0 : i32
    return %arg0, %c0_i32, %c0_i32_0 : i32, i32, i32
  }
  func.func @transform_3(%arg0: i32, %arg1: i32) -> (i32, i32, i32) {
    %c0_i32 = arith.constant 0 : i32
    %c0_i32_0 = arith.constant 0 : i32
    %c0_i32_1 = arith.constant 0 : i32
    return %arg0, %c0_i32, %c0_i32_0 : i32, i32, i32
  }
}

</mosaic_0001>

<llo_original>
// kernel: tpu_custom_call.1
$region0: #{tpu_custom_call.1}
  #allocation0 [shape = 'u32[]', space=smem, size = 0x4, offset = 0x4, fixed_abs, tag = 'smem constant byte address 0x4 - core index']
  #allocation1 [shape = 'u32[144,128]{1,0:T(1,128)}', space=vmem, size = 0x12000, scoped, tag = 'internal scratch']
  %s0 = inlined_call_operand.hbm [shape: f32[16,128], index: 0, kind: input, shape index: {}]
  %s1 = inlined_call_operand.hbm [shape: f32[16,128], index: 1, kind: input, shape index: {}]
  %s2 = inlined_call_operand.hbm [shape: f32[1,8,128], index: 2, kind: output, shape index: {0}]
  %s3 = inlined_call_operand.hbm [shape: f32[1,8,128], index: 3, kind: output, shape index: {1}]
  %4 = xla_tuple %s2, %s3
  %s5 = sld [smem:[#allocation0]]
  $region38: #{tpu_custom_call.1} parent=0
    _
  %s7 = ssub.s32 1, %s5
  %s8 = scalar_select 0, %s7, %s5
  $region1: #{tpu_custom_call.1} parent=0
    #allocation2 [shape = 'u8[8192]{0}', space=vmem, size = 0x2000, scoped, tag = 'input window, operand 0, single buffered']
    #allocation3 [shape = 's32[1]{0}', space=sflag, size = 0x4, scoped, tag = 'scoped memory for tpu_custom_call.1']
    #allocation4 [shape = 's32[1]{0}', space=sflag, size = 0x4, scoped, tag = 'scoped memory for tpu_custom_call.1']
    #allocation5 [shape = 'u8[8192]{0}', space=vmem, size = 0x2000, scoped, tag = 'input window, operand 1, single buffered']
    #allocation6 [shape = 's32[1]{0}', space=sflag, size = 0x4, scoped, tag = 'scoped memory for tpu_custom_call.1']
    #allocation7 [shape = 'u8[4096]{0}', space=vmem, size = 0x1000, scoped, tag = 'output window, operand 0, single buffered']
    #allocation8 [shape = 'u8[4096]{0}', space=vmem, size = 0x1000, scoped, tag = 'output window, operand 1, single buffered']
    #allocation9 [shape = 's32[1]{0}', space=sflag, size = 0x4, scoped, tag = 'scoped memory for tpu_custom_call.1']
    %9 = vsyncpa [#allocation3], 0
    %10 = vsyncpa [#allocation6], 0
    %11 = vsyncpa [#allocation4], 0
    %12 = vsyncpa [#allocation9], 0
    // Predicated region
    $region2: #{tpu_custom_call.1} parent=1 // pred_check
      _
    $region3: #{tpu_custom_call.1} parent=1 // pred_check_branch
      %14 = sbr.rel (0) target = $region5
    $region4: #{tpu_custom_call.1} parent=1 // pred_region
      %s15 = sadd.s32 0, 0
      %s16 = smul.u32 2, %s15
      %s18 = ssub.s32 256, 256
      %19 = vsyncadd [#allocation3], %s18
      %s20 = smul.addr %s16, 128
      %s21 = scalar_lea.hbm %s0, %s20
      %s22 = sshll.u32 [#allocation2], 4
      %s23 = int_to_ptr.vmem [resolvable:$true] %s22
      %28 = dma.hbm_to_vmem [thread:$0]  %s21, 256, %s23, [#allocation3], 128, 128, 8
    $region5: #{tpu_custom_call.1} parent=1 // pred_fallthru
      _
    // Predicated region
    $region6: #{tpu_custom_call.1} parent=1 // pred_check
      _
    $region7: #{tpu_custom_call.1} parent=1 // pred_check_branch
      %30 = sbr.rel (0) target = $region9
    $region8: #{tpu_custom_call.1} parent=1 // pred_region
      %s31 = sadd.s32 0, 0
      %s32 = smul.u32 2, %s31
      %s34 = ssub.s32 256, 256
      %35 = vsyncadd [#allocation6], %s34
      %s36 = smul.addr %s32, 128
      %s37 = scalar_lea.hbm %s1, %s36
      %s38 = sshll.u32 [#allocation5], 4
      %s39 = int_to_ptr.vmem [resolvable:$true] %s38
      %44 = dma.hbm_to_vmem [thread:$0]  %s37, 256, %s39, [#allocation6], 128, 128, 8
    $region9: #{tpu_custom_call.1} parent=1 // pred_fallthru
      _
    // Predicated region
    $region10: #{tpu_custom_call.1} parent=1 // pred_check
      _
    $region11: #{tpu_custom_call.1} parent=1 // pred_check_branch
      %46 = sbr.rel (0) target = $region13
    $region12: #{tpu_custom_call.1} parent=1 // pred_region
      %47 = dma.done [#allocation3], 256
    $region13: #{tpu_custom_call.1} parent=1 // pred_fallthru
      _
    // Predicated region
    $region14: #{tpu_custom_call.1} parent=1 // pred_check
      _
    $region15: #{tpu_custom_call.1} parent=1 // pred_check_branch
      %49 = sbr.rel (0) target = $region17
    $region16: #{tpu_custom_call.1} parent=1 // pred_region
      %50 = dma.done [#allocation6], 256
    $region17: #{tpu_custom_call.1} parent=1 // pred_fallthru
      _
    %s51 = sadd.s32 0, 0
    %s52 = smul.u32 2, %s51
    %s53 = sadd.s32 0, 0
    %s54 = smul.u32 2, %s53
    %p55 = scmp.eq.s32.totalorder 0, 0
    // Predicated region
    $region18: #{tpu_custom_call.1} parent=1 // pred_check
      %p56 = pneg %p55
    $region19: #{tpu_custom_call.1} parent=1 // pred_check_branch
      %58 = sbr.rel (%p56) target = $region21
    $region20: #{tpu_custom_call.1} parent=1 // pred_region
      %59 = vst [vmem:[#allocation7] sm:$0xff] 0.0
      %60 = vst [vmem:[#allocation8] sm:$0xff] 0.0
    $region21: #{tpu_custom_call.1} parent=1 // pred_fallthru
      _
    %v61 = vld [vmem:[#allocation2] sm:$0xff]
    %v62 = vld [vmem:[#allocation2 + $0x8] sm:$0xff]
    %v63 = vld [vmem:[#allocation5] sm:$0xff]
    %v64 = vld [vmem:[#allocation5 + $0x8] sm:$0xff]
    %v65 = vmul.f32 %v61, %v63
    %v66 = vmul.f32 %v62, %v64
    %v67 = vadd.f32 %v61, %v63
    %v68 = vadd.f32 %v62, %v64
    %v69 = vld [vmem:[#allocation7] sm:$0xff]
    %v70 = vadd.f32 %v65, %v66
    %v71 = vadd.f32 %v69, %v70
    %72 = vst [vmem:[#allocation7] sm:$0xff] %v71
    %v73 = vld [vmem:[#allocation8] sm:$0xff]
    %v74 = vadd.f32 %v67, %v68
    %v75 = vadd.f32 %v73, %v74
    %76 = vst [vmem:[#allocation8] sm:$0xff] %v75
    // Predicated region
    $region22: #{tpu_custom_call.1} parent=1 // pred_check
      _
    $region23: #{tpu_custom_call.1} parent=1 // pred_check_branch
      %78 = sbr.rel (0) target = $region25
    $region24: #{tpu_custom_call.1} parent=1 // pred_region
      %s80 = ssub.s32 128, 128
      %81 = vsyncadd [#allocation4], %s80
      %s83 = sshll.u32 [#allocation7], 4
      %s84 = int_to_ptr.vmem [resolvable:$true] %s83
      %86 = dma.vmem_to_hbm [thread:$0]  %s84, 128, %s2, [#allocation4]
    $region25: #{tpu_custom_call.1} parent=1 // pred_fallthru
      _
    // Predicated region
    $region26: #{tpu_custom_call.1} parent=1 // pred_check
      _
    $region27: #{tpu_custom_call.1} parent=1 // pred_check_branch
      %88 = sbr.rel (0) target = $region29
    $region28: #{tpu_custom_call.1} parent=1 // pred_region
      %s90 = ssub.s32 128, 128
      %91 = vsyncadd [#allocation9], %s90
      %s93 = sshll.u32 [#allocation8], 4
      %s94 = int_to_ptr.vmem [resolvable:$true] %s93
      %96 = dma.vmem_to_hbm [thread:$0]  %s94, 128, %s3, [#allocation9]
    $region29: #{tpu_custom_call.1} parent=1 // pred_fallthru
      _
    // Predicated region
    $region30: #{tpu_custom_call.1} parent=1 // pred_check
      _
    $region31: #{tpu_custom_call.1} parent=1 // pred_check_branch
      %98 = sbr.rel (0) target = $region33
    $region32: #{tpu_custom_call.1} parent=1 // pred_region
      %99 = dma.done [#allocation4], 128
    $region33: #{tpu_custom_call.1} parent=1 // pred_fallthru
      _
    // Predicated region
    $region34: #{tpu_custom_call.1} parent=1 // pred_check
      _
    $region35: #{tpu_custom_call.1} parent=1 // pred_check_branch
      %101 = sbr.rel (0) target = $region37
    $region36: #{tpu_custom_call.1} parent=1 // pred_region
      %102 = dma.done [#allocation9], 128
    $region37: #{tpu_custom_call.1} parent=1 // pred_fallthru
      _
    %103 = vsyncpa [#allocation3], 1
    %104 = vsyncpa [#allocation6], 1
    %105 = vsyncpa [#allocation4], 1
    %106 = vsyncpa [#allocation9], 1

</llo_original>
